<compile_context>
chip_gen: v6e
topology: v6e:2x2x1
jax: 0.10.0
libtpu: 0.0.40
codegen_flags: <defaults>
</compile_context>

<pallas_src>
import jax
import jax.numpy as jnp
from jax.experimental import pallas as pl
from jax.experimental.pallas import tpu as pltpu


def _round_up(x, m):
    return ((x + m - 1) // m) * m


def _choose_tile(n_lanes, channels, itemsize, batch, max_block_bytes=4 << 20):
    """Pick the sublane-row tile t for per-input blocks of shape (1, C, t, 128).

    Returns (t, min_sub, full_extent).  min_sub is the dtype-aware sublane
    alignment (8 for f32, 16 for bf16, 32 for int8/fp8); t is a multiple of it
    unless the whole pixel extent is smaller than min_sub (full-extent block).
    """
    min_sub = max(8, 32 // itemsize)

    if n_lanes < min_sub:
        # Tiny image: single full-extent block (trivially within budget).
        return n_lanes, min_sub, True

    # Largest multiple of min_sub under the per-input byte budget.
    t_budget = max_block_bytes // (channels * 128 * itemsize)
    t = max(min_sub, (t_budget // min_sub) * min_sub)
    # TODO(synk): for extreme channel counts (C*min_sub*128*itemsize > budget)
    # the minimum tile can exceed the target footprint; fine for typical C.

    # Never exceed the (rounded-up) pixel extent.
    t = min(t, _round_up(n_lanes, min_sub))

    # Megacore floor: keep at least 2 grid points so v7x's 2 TCs both work.
    if batch * pl.cdiv(n_lanes, t) < 2 and n_lanes >= 2 * min_sub:
        t = _round_up(pl.cdiv(n_lanes, 2), min_sub)

    return t, min_sub, False


def _make_mrse_kernel(inv_eps, t, out_rows, n_strips, n_lanes, full_extent):
    """inv_eps = eps_scale / scale**2 (x100 scale folded out of the kernel)."""
    needs_mask = (not full_extent) and (n_lanes % t != 0)

    def kernel(pred_ref, lab_ref, out_ref):
        if full_extent:
            # Small full-extent block: direct vectorized form, no masking.
            p = pred_ref[...].astype(jnp.float32)
            l = lab_ref[...].astype(jnp.float32)
            s = p + l
            num = jnp.sum(s * s, axis=1)            # (1, t, 128)   VPU adds
            den = jnp.sum(l * l, axis=1) + inv_eps  # (1, t, 128)
            out_ref[...] = (num / den).reshape(1, 1, out_rows, 128)
            return

        if needs_mask:
            j = pl.program_id(1)
            rows_valid = jnp.minimum(n_lanes - j * t, t)
            row_ids = jax.lax.broadcasted_iota(jnp.int32, (out_rows, 128), 0)

        def body(s_idx, acc):
            base = pl.multiple_of(s_idx * out_rows, out_rows)
            p = pred_ref[:, :, pl.ds(base, out_rows), :].astype(jnp.float32)
            l = lab_ref[:, :, pl.ds(base, out_rows), :].astype(jnp.float32)
            s = p + l
            num = jnp.sum(s * s, axis=1)[0]            # (out_rows, 128)
            den = jnp.sum(l * l, axis=1)[0] + inv_eps  # (out_rows, 128)
            # Exact divide keeps the 1e-5 tolerance; the kernel is HBM-bound so
            # pl.reciprocal(approx=True) buys nothing here.
            ratio = num / den
            if needs_mask:
                ratio = jnp.where((row_ids + base) < rows_valid, ratio, 0.0)
            return acc + ratio

        acc = jax.lax.fori_loop(
            0, n_strips, body, jnp.zeros((out_rows, 128), jnp.float32))
        out_ref[...] = acc.reshape(1, 1, out_rows, 128)

    return kernel


def mrse_loss(pred, inv_lab, *, eps_scale=0.001, scale=100.0):
    """pred, inv_lab: NCHW arrays of identical shape. Returns scalar f32 loss."""
    assert pred.shape == inv_lab.shape
    B, C, H, W = pred.shape
    HW = H * W
    # TODO(synk): H*W not a multiple of 128 would need a padded/masked lane
    # layout; the module's 256x256 (and all tested) images satisfy this.
    assert HW % 128 == 0, "H*W must be a multiple of 128"
    n_lanes = HW // 128

    itemsize = jnp.dtype(pred.dtype).itemsize
    t, min_sub, full_extent = _choose_tile(n_lanes, C, itemsize, B)
    n_blk = pl.cdiv(n_lanes, t)
    out_rows = n_lanes if full_extent else min_sub
    n_strips = 0 if full_extent else t // min_sub

    # Fold the x100 scale: num/den is invariant if eps is rescaled by 1/scale^2.
    inv_eps = eps_scale / (scale * scale)

    # Contiguous reshape: pure metadata, no HBM traffic.
    pred_r = pred.reshape(B, C, n_lanes, 128)
    lab_r = inv_lab.reshape(B, C, n_lanes, 128)

    kernel = _make_mrse_kernel(inv_eps, t, out_rows, n_strips, n_lanes,
                               full_extent)

    cost = pl.CostEstimate(
        flops=7 * B * C * HW,
        transcendentals=0,
        bytes_accessed=2 * B * C * HW * itemsize + B * n_blk * out_rows * 128 * 4,
    )

    partials = pl.pallas_call(
        kernel,
        out_shape=jax.ShapeDtypeStruct((B, n_blk, out_rows, 128), jnp.float32),
        grid_spec=pltpu.PrefetchScalarGridSpec(
            num_scalar_prefetch=0,
            grid=(B, n_blk),
            in_specs=[
                pl.BlockSpec((1, C, t, 128), lambda b, j: (b, 0, j, 0)),
                pl.BlockSpec((1, C, t, 128), lambda b, j: (b, 0, j, 0)),
            ],
            out_specs=pl.BlockSpec((1, 1, out_rows, 128),
                                   lambda b, j: (b, j, 0, 0)),
        ),
        compiler_params=pltpu.CompilerParams(
            dimension_semantics=("parallel", "parallel"),   # megacore-shardable
            vmem_limit_bytes=48 << 20,  # 4 MiB blocks x2 inputs x2 bufs = 16 MiB
        ),
        cost_estimate=cost,
    )(pred_r, lab_r)

    # Tiny final reduction + mean normalization in plain XLA (masked tail rows
    # contribute exact zeros, so dividing by B*HW is the correct mean).
    return jnp.sum(partials) / jnp.float32(B * HW)


def mrse_ref(pred, inv_lab, *, eps_scale=0.001, scale=100.0):
    """Plain-JAX reference mirroring the PyTorch forward (ddf_stn=None)."""
    trm = scale * pred.astype(jnp.float32)
    lab = scale * inv_lab.astype(jnp.float32)
    num = jnp.sum(jnp.square(trm + lab), axis=1)
    den = jnp.sum(jnp.square(lab), axis=1) + eps_scale
    return jnp.mean(num / den)


if __name__ == "__main__":
    key = jax.random.PRNGKey(0)
    k1, k2, k3, k4 = jax.random.split(key, 4)

    # Main case matching the module's NCHW inputs (small shapes).
    B, C, H, W = 2, 4, 16, 16
    pred = jax.random.normal(k1, (B, C, H, W), dtype=jnp.float32)
    inv_lab = jax.random.normal(k2, (B, C, H, W), dtype=jnp.float32)
    loss = jax.block_until_ready(mrse_loss(pred, inv_lab))
    ref = jax.block_until_ready(mrse_ref(pred, inv_lab))
    assert jnp.allclose(loss, ref, rtol=1e-5, atol=1e-5), (loss, ref)

    # bf16 inputs (halves HBM traffic on this strictly bandwidth-bound loss).
    loss_bf = jax.block_until_ready(
        mrse_loss(pred.astype(jnp.bfloat16), inv_lab.astype(jnp.bfloat16)))
    ref_bf = jax.block_until_ready(
        mrse_ref(pred.astype(jnp.bfloat16), inv_lab.astype(jnp.bfloat16)))
    assert jnp.allclose(loss_bf, ref_bf, rtol=5e-2, atol=5e-2), (loss_bf, ref_bf)

    # Strip-loop + megacore-floor path: B=1 is split into >=2 pixel blocks.
    p2 = jax.random.normal(k3, (1, 2, 64, 64), dtype=jnp.float32)
    l2 = jax.random.normal(k4, (1, 2, 64, 64), dtype=jnp.float32)
    out2 = jax.block_until_ready(mrse_loss(p2, l2))
    assert jnp.allclose(out2, mrse_ref(p2, l2), rtol=1e-5, atol=1e-5)

    # Ragged-tail path: HW/128 = 20 pixel rows tiled by t=16 (masked tail).
    p3 = jax.random.normal(k3, (1, 3, 40, 64), dtype=jnp.float32)
    l3 = jax.random.normal(k4, (1, 3, 40, 64), dtype=jnp.float32)
    out3 = jax.block_until_ready(mrse_loss(p3, l3))
    assert jnp.allclose(out3, mrse_ref(p3, l3), rtol=1e-5, atol=1e-5)

    print("KERNEL_OK")
</pallas_src>

<mosaic_0001>
module attributes {stable_mosaic.version = 11 : i64} {
  func.func @kernel(%arg0: i32, %arg1: i32, %arg2: memref<1x4x2x128xf32, #tpu.memory_space<vmem>>, %arg3: memref<1x4x2x128xf32, #tpu.memory_space<vmem>>, %arg4: memref<1x1x2x128xf32, #tpu.memory_space<vmem>>) attributes {dimension_semantics = [#tpu.dimension_semantics<parallel>, #tpu.dimension_semantics<parallel>], iteration_bounds = array<i64: 2, 1>, scalar_prefetch = 0 : i64, scratch_operands = 0 : i64, tpu.core_type = #tpu.core_type<tc>, window_params = [{transform_indices = @transform_0, window_bounds = array<i64: 1, 4, 2, 128>}, {transform_indices = @transform_1, window_bounds = array<i64: 1, 4, 2, 128>}, {transform_indices = @transform_2, window_bounds = array<i64: 1, 1, 2, 128>}]} {
    %c0 = arith.constant 0 : index
    %c0_0 = arith.constant 0 : index
    %c0_1 = arith.constant 0 : index
    %c0_2 = arith.constant 0 : index
    %0 = vector.load %arg2[%c0, %c0_0, %c0_1, %c0_2] : memref<1x4x2x128xf32, #tpu.memory_space<vmem>>, vector<1x4x2x128xf32>
    %c0_3 = arith.constant 0 : index
    %c0_4 = arith.constant 0 : index
    %c0_5 = arith.constant 0 : index
    %c0_6 = arith.constant 0 : index
    %1 = vector.load %arg3[%c0_3, %c0_4, %c0_5, %c0_6] : memref<1x4x2x128xf32, #tpu.memory_space<vmem>>, vector<1x4x2x128xf32>
    %2 = arith.addf %0, %1 : vector<1x4x2x128xf32>
    %3 = arith.mulf %2, %2 : vector<1x4x2x128xf32>
    %cst = arith.constant dense<0.000000e+00> : vector<1x2x128xf32>
    %4 = vector.multi_reduction <add>, %3, %cst [1] : vector<1x4x2x128xf32> to vector<1x2x128xf32>
    %5 = arith.mulf %1, %1 : vector<1x4x2x128xf32>
    %cst_7 = arith.constant dense<0.000000e+00> : vector<1x2x128xf32>
    %6 = vector.multi_reduction <add>, %5, %cst_7 [1] : vector<1x4x2x128xf32> to vector<1x2x128xf32>
    %cst_8 = arith.constant 1.000000e-07 : f32
    %7 = vector.broadcast %cst_8 : f32 to vector<1x2x128xf32>
    %8 = arith.addf %6, %7 : vector<1x2x128xf32>
    %9 = arith.divf %4, %8 : vector<1x2x128xf32>
    %10 = vector.shape_cast %9 : vector<1x2x128xf32> to vector<1x1x2x128xf32>
    %c0_9 = arith.constant 0 : index
    %c0_10 = arith.constant 0 : index
    %c0_11 = arith.constant 0 : index
    %c0_12 = arith.constant 0 : index
    %11 = vector.load %arg4[%c0_9, %c0_10, %c0_11, %c0_12] : memref<1x1x2x128xf32, #tpu.memory_space<vmem>>, vector<1x1x2x128xf32>
    tpu.vector_store %arg4[%c0_9, %c0_10, %c0_11, %c0_12], %10 {strides = array<i32>} : memref<1x1x2x128xf32, #tpu.memory_space<vmem>>, vector<1x1x2x128xf32>,
    return
  }
  func.func @transform_0(%arg0: i32, %arg1: i32) -> (i32, i32, i32, i32) {
    %c0_i32 = arith.constant 0 : i32
    %c0_i32_0 = arith.constant 0 : i32
    %c0_i32_1 = arith.constant 0 : i32
    return %arg0, %c0_i32, %arg1, %c0_i32_0 : i32, i32, i32, i32
  }
  func.func @transform_1(%arg0: i32, %arg1: i32) -> (i32, i32, i32, i32) {
    %c0_i32 = arith.constant 0 : i32
    %c0_i32_0 = arith.constant 0 : i32
    %c0_i32_1 = arith.constant 0 : i32
    return %arg0, %c0_i32, %arg1, %c0_i32_0 : i32, i32, i32, i32
  }
  func.func @transform_2(%arg0: i32, %arg1: i32) -> (i32, i32, i32, i32) {
    %c0_i32 = arith.constant 0 : i32
    %c0_i32_0 = arith.constant 0 : i32
    %c0_i32_1 = arith.constant 0 : i32
    return %arg0, %arg1, %c0_i32, %c0_i32_0 : i32, i32, i32, i32
  }
}

</mosaic_0001>

<llo_original>
// kernel: tpu_custom_call.1
$region0: #{tpu_custom_call.1}
  #allocation0 [shape = 'u32[]', space=smem, size = 0x4, offset = 0x4, fixed_abs, tag = 'smem constant byte address 0x4 - core index']
  #allocation1 [shape = 'u32[144,128]{1,0:T(1,128)}', space=vmem, size = 0x12000, scoped, tag = 'internal scratch']
  %s0 = inlined_call_operand.hbm [shape: f32[2,4,2,128], index: 0, kind: input, shape index: {}]
  %s1 = inlined_call_operand.hbm [shape: f32[2,4,2,128], index: 1, kind: input, shape index: {}]
  %s2 = inlined_call_operand.hbm [shape: f32[2,1,2,128], index: 2, kind: output, shape index: {}]
  %s3 = sld [smem:[#allocation0]]
  $region49: #{tpu_custom_call.1} parent=0
    _
  %s5 = ssub.s32 1, %s3
  %s6 = scalar_select 0, %s5, %s3
  $region1: #{tpu_custom_call.1} parent=0
    #allocation2 [shape = 'u8[8192]{0}', space=vmem, size = 0x2000, scoped, tag = 'input window, operand 0']
    #allocation3 [shape = 's32[2]{0}', space=sflag, size = 0x8, scoped, tag = 'scoped memory for tpu_custom_call.1']
    #allocation4 [shape = 's32[2]{0}', space=sflag, size = 0x8, scoped, tag = 'scoped memory for tpu_custom_call.1']
    #allocation5 [shape = 'u8[8192]{0}', space=vmem, size = 0x2000, scoped, tag = 'input window, operand 1']
    #allocation6 [shape = 's32[2]{0}', space=sflag, size = 0x8, scoped, tag = 'scoped memory for tpu_custom_call.1']
    #allocation7 [shape = 'u8[2048]{0}', space=vmem, size = 0x800, scoped, tag = 'output window, operand 0']
    %7 = vsyncpa [#allocation3], 0
    %s8 = scalar_lea.sflag [#allocation3], 1
    %9 = vsyncpa %s8, 0
    %10 = vsyncpa [#allocation6], 0
    %s11 = scalar_lea.sflag [#allocation6], 1
    %12 = vsyncpa %s11, 0
    %13 = vsyncpa [#allocation4], 0
    %s14 = scalar_lea.sflag [#allocation4], 1
    %15 = vsyncpa %s14, 0
    loop: start=0, step=1, limit=4
    $region2: #{tpu_custom_call.1} parent=1 // loop_pre_header
      _
    $region3: #{tpu_custom_call.1} parent=1 // loop_header
      %s17 = sphi 0, %s21
      %p18 = scmp.ge.s32.totalorder %s17, 4
      %s24 = sphi 0, %s36
      %s25 = sphi 0, %s32
      %s26 = sphi 0, %s24
      %s27 = sphi 0, %s25
      %s28 = sphi 0, %s26
      %s29 = sphi 0, %s27
      %s41 = sphi 0, %s43
      %s44 = sphi 0, %s41
      %s45 = sphi 0, %s44
      %s61 = sphi 0, %s45
      %s69 = sphi 0, %s71
      %s72 = sphi 0, %s69
      %s73 = sphi 0, %s72
      %s89 = sphi 0, %s73
      %s97 = sphi 0, %s99
      %s100 = sphi 0, %s97
      %s101 = sphi 0, %s100
      %s117 = sphi 0, %s101
    $region4: #{tpu_custom_call.1} parent=1 // loop_header_branch
      %20 = sbr.rel (%p18) target = $region8
    $region5: #{tpu_custom_call.1} parent=1 // loop_body
      %s22 = ssub.s32 %s17, 1
      %s23 = ssub.s32 %s17, 2
      %s30 = sadd.s32 1, %s25
      %p31 = scmp.ge.s32.totalorder %s30, 1
      %s32 = scalar_select %p31, 0, %s30
      %s33 = sadd.s32 1, %s24
      %s34 = scalar_select %p31, %s33, %s24
      %p35 = scmp.ge.s32.totalorder %s34, 2
      %s36 = scalar_select %p35, 0, %s34
      %s37 = ssub.s32 %s24, %s36
      %s38 = ssub.s32 %s25, %s32
      %s39 = sor.u32 %s37, %s38
      %p40 = scmp.eq.s32.totalorder %s39, 0
      %s42 = sadd.s32 %s41, 1
      %s43 = scalar_select %p40, %s41, %s42
      %p46 = pneg %p40
      %p47 = scmp.eq.s32.totalorder %s17, 1
      %p48 = por %p46, %p47
      %p49 = scmp.ne.s32.totalorder %s41, %s44
      %p50 = scmp.eq.s32.totalorder %s17, 0
      %p51 = por %p49, %p50
      %p52 = scmp.ne.s32.totalorder %s41, %s44
      %p53 = scmp.eq.s32.totalorder %s22, 1
      %p54 = por %p52, %p53
      %p55 = scmp.ne.s32.totalorder %s44, %s45
      %p56 = scmp.eq.s32.totalorder %s22, 0
      %p57 = por %p55, %p56
      %p58 = scmp.ne.s32.totalorder %s44, %s45
      %p59 = scmp.eq.s32.totalorder %s23, 1
      %p60 = por %p58, %p59
      %p62 = scmp.ne.s32.totalorder %s45, %s61
      %p63 = scmp.eq.s32.totalorder %s23, 0
      %p64 = por %p62, %p63
      %s65 = ssub.s32 %s24, %s36
      %s66 = ssub.s32 %s25, %s32
      %s67 = sor.u32 %s65, %s66
      %p68 = scmp.eq.s32.totalorder %s67, 0
      %s70 = sadd.s32 %s69, 1
      %s71 = scalar_select %p68, %s69, %s70
      %p74 = pneg %p68
      %p75 = scmp.eq.s32.totalorder %s17, 1
      %p76 = por %p74, %p75
      %p77 = scmp.ne.s32.totalorder %s69, %s72
      %p78 = scmp.eq.s32.totalorder %s17, 0
      %p79 = por %p77, %p78
      %p80 = scmp.ne.s32.totalorder %s69, %s72
      %p81 = scmp.eq.s32.totalorder %s22, 1
      %p82 = por %p80, %p81
      %p83 = scmp.ne.s32.totalorder %s72, %s73
      %p84 = scmp.eq.s32.totalorder %s22, 0
      %p85 = por %p83, %p84
      %p86 = scmp.ne.s32.totalorder %s72, %s73
      %p87 = scmp.eq.s32.totalorder %s23, 1
      %p88 = por %p86, %p87
      %p90 = scmp.ne.s32.totalorder %s73, %s89
      %p91 = scmp.eq.s32.totalorder %s23, 0
      %p92 = por %p90, %p91
      %s93 = ssub.s32 %s24, %s36
      %s94 = ssub.s32 %s25, %s32
      %s95 = sor.u32 %s93, %s94
      %p96 = scmp.eq.s32.totalorder %s95, 0
      %s98 = sadd.s32 %s97, 1
      %s99 = scalar_select %p96, %s97, %s98
      %p102 = pneg %p96
      %p103 = scmp.eq.s32.totalorder %s17, 1
      %p104 = por %p102, %p103
      %p105 = scmp.ne.s32.totalorder %s97, %s100
      %p106 = scmp.eq.s32.totalorder %s17, 0
      %p107 = por %p105, %p106
      %p108 = scmp.ne.s32.totalorder %s97, %s100
      %p109 = scmp.eq.s32.totalorder %s22, 1
      %p110 = por %p108, %p109
      %p111 = scmp.ne.s32.totalorder %s100, %s101
      %p112 = scmp.eq.s32.totalorder %s22, 0
      %p113 = por %p111, %p112
      %p114 = scmp.ne.s32.totalorder %s100, %s101
      %p115 = scmp.eq.s32.totalorder %s23, 1
      %p116 = por %p114, %p115
      %p118 = scmp.ne.s32.totalorder %s101, %s117
      %p119 = scmp.eq.s32.totalorder %s23, 0
      %p120 = por %p118, %p119
      %p121 = scmp.le.s32.totalorder 1, %s17
      %p122 = scmp.lt.s32.totalorder %s17, 3
      %p123 = pnand %p121, %p122
      %p124 = pneg %p123
      // Predicated region
      $region9: #{tpu_custom_call.1} parent=5 // pred_check
        _
      $region10: #{tpu_custom_call.1} parent=5 // pred_check_branch
        %126 = sbr.rel (%p123) target = $region12
      $region11: #{tpu_custom_call.1} parent=5 // pred_region
        %s127 = ssub.s32 %s17, 1
      $region12: #{tpu_custom_call.1} parent=5 // pred_fallthru
        _
      %p128 = scmp.lt.s32.totalorder %s17, 2
      // Predicated region
      $region13: #{tpu_custom_call.1} parent=5 // pred_check
        %p129 = pneg %p128
      $region14: #{tpu_custom_call.1} parent=5 // pred_check_branch
        %131 = sbr.rel (%p129) target = $region16
      $region15: #{tpu_custom_call.1} parent=5 // pred_region
        // Predicated region
        $region17: #{tpu_custom_call.1} parent=15 // pred_check
          %p132 = pneg %p51
        $region18: #{tpu_custom_call.1} parent=15 // pred_check_branch
          %134 = sbr.rel (%p132) target = $region20
        $region19: #{tpu_custom_call.1} parent=15 // pred_region
          %s135 = sand.u32 %s41, 1
          %s136 = scalar_lea.sflag [#allocation3], %s135
          %s137 = sand.u32 %s41, 1
          %s138 = smul.addr %s137, 8
          %s139 = scalar_lea.vmem [#allocation2], %s138
          %s141 = ssub.s32 128, 128
          %142 = vsyncadd %s136, %s141
          %s143 = smul.addr %s24, 4
          %s144 = sadd.s32 %s25, %s143
          %s145 = smul.addr %s144, 32
          %s146 = scalar_lea.hbm %s0, %s145
          %s147 = sshll.u32 %s139, 4
          %s148 = int_to_ptr.vmem [resolvable:$true] %s147
          %153 = dma.hbm_to_vmem [thread:$0]  %s146, 128, %s148, %s136, 32, 32, 2
        $region20: #{tpu_custom_call.1} parent=15 // pred_fallthru
          _
        // Predicated region
        $region21: #{tpu_custom_call.1} parent=15 // pred_check
          %p154 = pneg %p79
        $region22: #{tpu_custom_call.1} parent=15 // pred_check_branch
          %156 = sbr.rel (%p154) target = $region24
        $region23: #{tpu_custom_call.1} parent=15 // pred_region
          %s157 = sand.u32 %s69, 1
          %s158 = scalar_lea.sflag [#allocation6], %s157
          %s159 = sand.u32 %s69, 1
          %s160 = smul.addr %s159, 8
          %s161 = scalar_lea.vmem [#allocation5], %s160
          %s163 = ssub.s32 128, 128
          %164 = vsyncadd %s158, %s163
          %s165 = smul.addr %s24, 4
          %s166 = sadd.s32 %s25, %s165
          %s167 = smul.addr %s166, 32
          %s168 = scalar_lea.hbm %s1, %s167
          %s169 = sshll.u32 %s161, 4
          %s170 = int_to_ptr.vmem [resolvable:$true] %s169
          %175 = dma.hbm_to_vmem [thread:$0]  %s168, 128, %s170, %s158, 32, 32, 2
        $region24: #{tpu_custom_call.1} parent=15 // pred_fallthru
          _
      $region16: #{tpu_custom_call.1} parent=5 // pred_fallthru
        _
      %p176 = scmp.le.s32.totalorder 1, %s17
      %p177 = scmp.lt.s32.totalorder %s17, 3
      %p178 = pnand %p176, %p177
      %p179 = pneg %p178
      // Predicated region
      $region25: #{tpu_custom_call.1} parent=5 // pred_check
        _
      $region26: #{tpu_custom_call.1} parent=5 // pred_check_branch
        %181 = sbr.rel (%p178) target = $region28
      $region27: #{tpu_custom_call.1} parent=5 // pred_region
        %s182 = ssub.s32 %s17, 1
        %s183 = sand.u32 %s44, 1
        %s184 = scalar_lea.sflag [#allocation3], %s183
        %s185 = sand.u32 %s44, 1
        %s186 = smul.addr %s185, 8
        %s187 = scalar_lea.vmem [#allocation2], %s186
        // Predicated region
        $region29: #{tpu_custom_call.1} parent=27 // pred_check
          %p188 = pneg %p57
        $region30: #{tpu_custom_call.1} parent=27 // pred_check_branch
          %190 = sbr.rel (%p188) target = $region32
        $region31: #{tpu_custom_call.1} parent=27 // pred_region
          %191 = dma.done %s184, 128
        $region32: #{tpu_custom_call.1} parent=27 // pred_fallthru
          _
        %s192 = sand.u32 %s72, 1
        %s193 = scalar_lea.sflag [#allocation6], %s192
        %s194 = sand.u32 %s72, 1
        %s195 = smul.addr %s194, 8
        %s196 = scalar_lea.vmem [#allocation5], %s195
        // Predicated region
        $region33: #{tpu_custom_call.1} parent=27 // pred_check
          %p197 = pneg %p85
        $region34: #{tpu_custom_call.1} parent=27 // pred_check_branch
          %199 = sbr.rel (%p197) target = $region36
        $region35: #{tpu_custom_call.1} parent=27 // pred_region
          %200 = dma.done %s193, 128
        $region36: #{tpu_custom_call.1} parent=27 // pred_fallthru
          _
        %s201 = sand.u32 %s44, 1
        %s202 = scalar_lea.sflag [#allocation3], %s201
        %s203 = sand.u32 %s44, 1
        %s204 = smul.addr %s203, 8
        %s205 = scalar_lea.vmem [#allocation2], %s204
        %p206 = pneg %p57
        %p207 = pneg %p54
        %s208 = sand.u32 %s72, 1
        %s209 = scalar_lea.sflag [#allocation6], %s208
        %s210 = sand.u32 %s72, 1
        %s211 = smul.addr %s210, 8
        %s212 = scalar_lea.vmem [#allocation5], %s211
        %p213 = pneg %p85
        %p214 = pneg %p82
        %p215 = pneg %p113
        %p216 = pneg %p110
        %s217 = sand.u32 %s100, 1
        %s218 = scalar_lea.sflag [#allocation4], %s217
        %s219 = sand.u32 %s100, 1
        %s220 = smul.addr %s219, 2
        %s221 = scalar_lea.vmem [#allocation7], %s220
        %v222 = vld [vmem:[%s187] sm:$0x3]
        %v223 = vld [vmem:[%s187 + $0x2] sm:$0x3]
        %v224 = vld [vmem:[%s187 + $0x4] sm:$0x3]
        %v225 = vld [vmem:[%s187 + $0x6] sm:$0x3]
        %v226 = vld [vmem:[%s196] sm:$0x3]
        %v227 = vld [vmem:[%s196 + $0x2] sm:$0x3]
        %v228 = vld [vmem:[%s196 + $0x4] sm:$0x3]
        %v229 = vld [vmem:[%s196 + $0x6] sm:$0x3]
        %v230 = vadd.f32 %v222, %v226
        %v231 = vadd.f32 %v223, %v227
        %v232 = vadd.f32 %v224, %v228
        %v233 = vadd.f32 %v225, %v229
        %v234 = vmul.f32 %v230, %v230
        %v235 = vmul.f32 %v231, %v231
        %v236 = vmul.f32 %v232, %v232
        %v237 = vmul.f32 %v233, %v233
        %vm238 = vcmask 1041408
        %v239 = vsel %vm238, %v234, 0.0
        %v240 = vsel %vm238, %v235, 0.0
        %v241 = vadd.f32 %v239, %v240
        %v242 = vsel %vm238, %v236, 0.0
        %v243 = vadd.f32 %v241, %v242
        %v244 = vsel %vm238, %v237, 0.0
        %v245 = vadd.f32 %v243, %v244
        %v246 = vmul.f32 %v226, %v226
        %v247 = vmul.f32 %v227, %v227
        %v248 = vmul.f32 %v228, %v228
        %v249 = vmul.f32 %v229, %v229
        %v250 = vsel %vm238, %v246, 0.0
        %v251 = vsel %vm238, %v247, 0.0
        %v252 = vadd.f32 %v250, %v251
        %v253 = vsel %vm238, %v248, 0.0
        %v254 = vadd.f32 %v252, %v253
        %v255 = vsel %vm238, %v249, 0.0
        %v256 = vadd.f32 %v254, %v255
        %v257 = vadd.f32 %v256, 1e-07
        %v258 = vrcp.pop %v257
        %v259 = vmul.f32 %v245, %v258
        %260 = vst [vmem:[%s221] sm:$0x3] %v259
        %s261 = sand.u32 %s100, 1
        %s262 = scalar_lea.sflag [#allocation4], %s261
        %s263 = sand.u32 %s100, 1
        %s264 = smul.addr %s263, 2
        %s265 = scalar_lea.vmem [#allocation7], %s264
        // Predicated region
        $region37: #{tpu_custom_call.1} parent=27 // pred_check
          %p266 = pneg %p110
        $region38: #{tpu_custom_call.1} parent=27 // pred_check_branch
          %268 = sbr.rel (%p266) target = $region40
        $region39: #{tpu_custom_call.1} parent=27 // pred_region
          %s270 = ssub.s32 32, 32
          %271 = vsyncadd %s262, %s270
          %s272 = sadd.s32 %s27, %s26
          %s273 = smul.addr %s272, 32
          %s274 = scalar_lea.hbm %s2, %s273
          %s276 = sshll.u32 %s265, 4
          %s277 = int_to_ptr.vmem [resolvable:$true] %s276
          %279 = dma.vmem_to_hbm [thread:$0]  %s277, 32, %s274, %s262
        $region40: #{tpu_custom_call.1} parent=27 // pred_fallthru
          _
      $region28: #{tpu_custom_call.1} parent=5 // pred_fallthru
        _
      %p280 = scmp.le.s32.totalorder 2, %s17
      // Predicated region
      $region41: #{tpu_custom_call.1} parent=5 // pred_check
        %p281 = pneg %p280
      $region42: #{tpu_custom_call.1} parent=5 // pred_check_branch
        %283 = sbr.rel (%p281) target = $region44
      $region43: #{tpu_custom_call.1} parent=5 // pred_region
        %s284 = ssub.s32 %s17, 2
        // Predicated region
        $region45: #{tpu_custom_call.1} parent=43 // pred_check
          %p285 = pneg %p116
        $region46: #{tpu_custom_call.1} parent=43 // pred_check_branch
          %287 = sbr.rel (%p285) target = $region48
        $region47: #{tpu_custom_call.1} parent=43 // pred_region
          %s288 = sand.u32 %s101, 1
          %s289 = scalar_lea.sflag [#allocation4], %s288
          %s290 = sand.u32 %s101, 1
          %s291 = smul.addr %s290, 2
          %s292 = scalar_lea.vmem [#allocation7], %s291
          %293 = dma.done %s289, 32
        $region48: #{tpu_custom_call.1} parent=43 // pred_fallthru
          _
      $region44: #{tpu_custom_call.1} parent=5 // pred_fallthru
        _
    $region6: #{tpu_custom_call.1} parent=1 // loop_footer
      %s21 = sadd.s32 1, %s17
    $region7: #{tpu_custom_call.1} parent=1 // loop_footer_branch
      %16 = sbr.rel target = $region3
    $region8: #{tpu_custom_call.1} parent=1 // loop_exit
      _
    %294 = vsyncpa [#allocation3], 1
    %s295 = scalar_lea.sflag [#allocation3], 1
    %296 = vsyncpa %s295, 1
    %297 = vsyncpa [#allocation6], 1
    %s298 = scalar_lea.sflag [#allocation6], 1
    %299 = vsyncpa %s298, 1
    %300 = vsyncpa [#allocation4], 1
    %s301 = scalar_lea.sflag [#allocation4], 1
    %302 = vsyncpa %s301, 1

</llo_original>
